<compile_context>
chip_gen: v7x
topology: tpu7x:2x2x1
jax: 0.10.0
libtpu: 0.0.40
codegen_flags: <defaults>
</compile_context>

<pallas_src>
import functools
import math

import jax
import jax.numpy as jnp
from jax.experimental import pallas as pl
from jax.experimental.pallas import tpu as pltpu


# ---------------------------------------------------------------------------
# kernel 1: fused QKV projection (weight DMA'd once, single-pass contraction)
# ---------------------------------------------------------------------------
def _qkv_proj_kernel(x_ref, w_ref, b_ref, q_ref, k_ref, v_ref):
    """qkv = x @ w_attn + b_attn for one (TM, C) row tile.  Grid: (B, T//TM).

    The (C, 3C) weight and (1, 3C) bias blocks have constant index_maps, so
    they are fetched from HBM exactly once for the whole grid.  The attention
    scale is pre-folded into the q columns of w_attn/b_attn by the wrapper.
    """
    qkv = jnp.dot(x_ref[0], w_ref[...],
                  preferred_element_type=jnp.float32) + b_ref[...]   # (TM, 3C) f32
    C = q_ref.shape[-1]
    q_ref[0] = qkv[:, 0 * C:1 * C].astype(q_ref.dtype)
    k_ref[0] = qkv[:, 1 * C:2 * C].astype(k_ref.dtype)
    v_ref[0] = qkv[:, 2 * C:3 * C].astype(v_ref.dtype)


# ---------------------------------------------------------------------------
# kernel 2: flash attention (head-major state) + fused output projection
# ---------------------------------------------------------------------------
def _flash_attn_proj_kernel(q_ref, k_ref, v_ref, wp_ref, bp_ref, o_ref,
                            m_scr, l_scr, acc_scr, *, n_head, approx_recip):
    """Online-softmax attention over kv tiles + fused output projection.

    Grid: (B, T//TQ, T//TKV); kv axis last / 'arbitrary'.  When TKV == T the
    k/v block indices are constant over (qi, ki), so K/V are DMA'd once per
    batch element and stay VMEM-resident across all q tiles.  Per-head state
    is head-major (leading axis h): every kv-step update is a full-tile
    store, never a lane-offset masked slice.  Heads are merged only in the
    finalize via per-head row-slices of the output projection.
    """
    ki = pl.program_id(2)

    @pl.when(ki == 0)
    def _init():
        m_scr[...] = jnp.full_like(m_scr, -jnp.inf)
        l_scr[...] = jnp.zeros_like(l_scr)
        acc_scr[...] = jnp.zeros_like(acc_scr)

    q = q_ref[0]                          # (TQ, C)  (scale already folded in)
    k = k_ref[0]                          # (TKV, C)
    v = v_ref[0]                          # (TKV, C)
    C = q.shape[-1]
    hd = C // n_head

    # Static unroll over heads (n_head is small; per-head temporaries are
    # (TQ, TKV)-sized, so they live in VMEM regardless).
    for h in range(n_head):
        cs = slice(h * hd, (h + 1) * hd)
        # scores q_h @ k_h^T (contract over hd), f32 accumulation on the MXU.
        s = jax.lax.dot_general(q[:, cs], k[:, cs],
                                (((1,), (1,)), ((), ())),
                                preferred_element_type=jnp.float32)   # (TQ, TKV)
        m_prev = m_scr[h]                                             # (TQ, 1)
        m_new = jnp.maximum(m_prev, jnp.max(s, axis=-1, keepdims=True))
        alpha = jnp.exp(m_prev - m_new)                               # (TQ, 1)
        # exp kept in f32; a bf16 exp (v6e/v7x EUP fast path) is a possible
        # further win if profiling shows the EUP slot saturating.
        p = jnp.exp(s - m_new)                                        # (TQ, TKV)
        l_scr[h] = alpha * l_scr[h] + jnp.sum(p, axis=-1, keepdims=True)
        acc_scr[h] = alpha * acc_scr[h] + jnp.dot(
            p.astype(v.dtype), v[:, cs], preferred_element_type=jnp.float32)
        m_scr[h] = m_new

    @pl.when(ki == pl.num_programs(2) - 1)
    def _finalize():
        # y @ Wp == sum_h y_h @ Wp[h*hd:(h+1)*hd, :] -> consume the head-major
        # accumulator directly (no (n_head,TQ,hd)->(TQ,C) lane re-assembly).
        out = None
        for h in range(n_head):
            inv = pl.reciprocal(l_scr[h], approx=approx_recip)        # (TQ, 1)
            y_h = (acc_scr[h] * inv).astype(wp_ref.dtype)             # (TQ, hd)
            contrib = jnp.dot(y_h, wp_ref[h * hd:(h + 1) * hd, :],
                              preferred_element_type=jnp.float32)     # (TQ, C)
            out = contrib if out is None else out + contrib
        o_ref[0] = (out + bp_ref[...]).astype(o_ref.dtype)


# ---------------------------------------------------------------------------
# wrapper: VMEM-budget-aware tiling + parameter prep
# ---------------------------------------------------------------------------
def _vmem_limit_bytes():
    """~85% of physical VMEM, capped at 112 MiB (v5e/v6e ~108 MiB, v7x ~54 MiB)."""
    try:
        cap = pltpu.get_tpu_info().vmem_capacity_bytes
        return int(min(112 * 1024 * 1024, int(cap * 0.85)))
    except Exception:
        return 64 * 1024 * 1024          # conservative; safe on every generation


def _pick_tile(n, cap):
    """Largest x8 divisor of n that is <= cap (n itself if n <= cap)."""
    if n <= cap:
        return n
    t = (cap // 8) * 8
    while t >= 8:
        if n % t == 0:
            return t
        t -= 8
    return n   # no x8 divisor <= cap; fall back to the full dim


def _shrink_tile(t, n):
    """Next smaller x8 divisor of n below t (returns t if none exists)."""
    c = ((t - 1) // 8) * 8
    while c >= 8:
        if n % c == 0:
            return c
        c -= 8
    return t


def self_attention(x, w_attn, b_attn, w_proj, b_proj, n_head, *,
                   compute_dtype=jnp.bfloat16):
    """x: (B,T,C); w_attn: (C,3C); b_attn: (3C,); w_proj: (C,C); b_proj: (C,)."""
    B, T, C = x.shape
    assert C % n_head == 0
    hd = C // n_head

    x_bytes = jnp.dtype(x.dtype).itemsize
    c_bytes = jnp.dtype(compute_dtype).itemsize

    vmem_limit = _vmem_limit_bytes()
    budget = int(vmem_limit * 0.70)        # headroom for compiler temporaries

    # ---- attention tiles ---------------------------------------------------
    # Big q tiles reduce K/V re-streaming (factor T/TQ) and amortize grid
    # overhead; start with K/V fully resident (TKV = T) and shrink TKV first
    # when VMEM is tight (v7x), TQ only as a last resort.
    tq_pref = 512 if vmem_limit >= 96 * 1024 * 1024 else 256
    TQ = _pick_tile(T, tq_pref)
    TKV = T

    def est_attn(tq, tkv):
        return (2 * C * C * c_bytes                       # w_proj (double-buffered)
                + 2 * 2 * tkv * C * c_bytes               # k + v blocks
                + 2 * tq * C * c_bytes                    # q block
                + 2 * tq * C * x_bytes                    # output block
                + tq * C * 4 + 2 * n_head * tq * 4        # acc / m / l scratch
                + 3 * tq * tkv * 4)                       # s / p temporaries

    while est_attn(TQ, TKV) > budget:
        if TKV > 128:
            nk = _shrink_tile(TKV, T)
            if nk < TKV:
                TKV = nk
                continue
        if TQ > 128:
            nq = _shrink_tile(TQ, T)
            if nq < TQ:
                TQ = nq
                continue
        break

    # ---- qkv-projection row tile -------------------------------------------
    TM = _pick_tile(T, tq_pref)

    def est_qkv(tm):
        return (2 * C * 3 * C * c_bytes                   # w_attn (fetched once)
                + 2 * tm * C * c_bytes                    # x block
                + 3 * 2 * tm * C * c_bytes                # q/k/v output blocks
                + 2 * tm * 3 * C * 4)                     # qkv f32 temporary

    while est_qkv(TM) > budget and TM > 128:
        nm = _shrink_tile(TM, T)
        if nm >= TM:
            break
        TM = nm

    # ---- parameter prep ------------------------------------------------------
    # Fold the 1/sqrt(head_dim) attention scale into the q columns of
    # w_attn/b_attn (free at trace time); biases stay f32, matmul inputs go
    # to the compute dtype before the DMA (halves HBM traffic in bf16).
    scale = 1.0 / math.sqrt(hd)
    w_attn_f = w_attn.astype(jnp.float32)
    b_attn_f = b_attn.astype(jnp.float32)
    w_attn_c = w_attn_f.at[:, :C].multiply(scale).astype(compute_dtype)
    b_attn2 = b_attn_f.at[:C].multiply(scale).reshape(1, 3 * C)      # f32
    w_proj_c = w_proj.astype(compute_dtype)
    b_proj2 = b_proj.reshape(1, C).astype(jnp.float32)
    xc = x.astype(compute_dtype)

    cparams_qkv = pltpu.CompilerParams(
        dimension_semantics=("parallel", "parallel"),
        vmem_limit_bytes=vmem_limit,
    )
    cparams_attn = pltpu.CompilerParams(
        dimension_semantics=("parallel", "parallel", "arbitrary"),
        vmem_limit_bytes=vmem_limit,
    )

    # --- kernel 1: fused QKV projection --------------------------------------
    q, k, v = pl.pallas_call(
        _qkv_proj_kernel,
        out_shape=(
            jax.ShapeDtypeStruct((B, T, C), compute_dtype),
            jax.ShapeDtypeStruct((B, T, C), compute_dtype),
            jax.ShapeDtypeStruct((B, T, C), compute_dtype),
        ),
        grid_spec=pltpu.PrefetchScalarGridSpec(
            num_scalar_prefetch=0,
            grid=(B, T // TM),
            in_specs=[
                pl.BlockSpec((1, TM, C), lambda b, ti: (b, ti, 0)),
                pl.BlockSpec((C, 3 * C), lambda b, ti: (0, 0)),     # constant -> 1 DMA
                pl.BlockSpec((1, 3 * C), lambda b, ti: (0, 0)),
            ],
            out_specs=[
                pl.BlockSpec((1, TM, C), lambda b, ti: (b, ti, 0)),
                pl.BlockSpec((1, TM, C), lambda b, ti: (b, ti, 0)),
                pl.BlockSpec((1, TM, C), lambda b, ti: (b, ti, 0)),
            ],
        ),
        compiler_params=cparams_qkv,
    )(xc, w_attn_c, b_attn2)

    # --- kernel 2: flash attention + fused output projection -----------------
    out = pl.pallas_call(
        functools.partial(_flash_attn_proj_kernel, n_head=n_head,
                          approx_recip=(compute_dtype != jnp.float32)),
        out_shape=jax.ShapeDtypeStruct((B, T, C), x.dtype),
        grid_spec=pltpu.PrefetchScalarGridSpec(
            num_scalar_prefetch=0,
            grid=(B, T // TQ, T // TKV),
            in_specs=[
                pl.BlockSpec((1, TQ, C), lambda b, qi, ki: (b, qi, 0)),
                pl.BlockSpec((1, TKV, C), lambda b, qi, ki: (b, ki, 0)),
                pl.BlockSpec((1, TKV, C), lambda b, qi, ki: (b, ki, 0)),
                pl.BlockSpec((C, C), lambda b, qi, ki: (0, 0)),      # constant -> 1 DMA
                pl.BlockSpec((1, C), lambda b, qi, ki: (0, 0)),
            ],
            out_specs=pl.BlockSpec((1, TQ, C), lambda b, qi, ki: (b, qi, 0)),
            scratch_shapes=[
                pltpu.VMEM((n_head, TQ, 1), jnp.float32),    # running max  m
                pltpu.VMEM((n_head, TQ, 1), jnp.float32),    # running sum  l
                pltpu.VMEM((n_head, TQ, hd), jnp.float32),   # head-major accumulator
            ],
        ),
        compiler_params=cparams_attn,
    )(q, k, v, w_proj_c, b_proj2)
    return out


# ---------------------------------------------------------------------------
# plain-JAX reference (mirrors the PyTorch forward)
# ---------------------------------------------------------------------------
def self_attention_ref(x, w_attn, b_attn, w_proj, b_proj, n_head):
    B, T, C = x.shape
    hd = C // n_head
    qkv = x @ w_attn + b_attn                               # (B, T, 3C)
    q, k, v = jnp.split(qkv, 3, axis=2)
    q = q.reshape(B, T, n_head, hd).transpose(0, 2, 1, 3)   # (B, H, T, hd)
    k = k.reshape(B, T, n_head, hd).transpose(0, 2, 1, 3)
    v = v.reshape(B, T, n_head, hd).transpose(0, 2, 1, 3)
    attn = (q @ jnp.swapaxes(k, -2, -1)) * (1.0 / math.sqrt(hd))
    attn = jax.nn.softmax(attn, axis=-1)
    y = attn @ v                                            # (B, H, T, hd)
    y = y.transpose(0, 2, 1, 3).reshape(B, T, C)
    return y @ w_proj + b_proj


if __name__ == "__main__":
    # Small config consistent with the module: n_embd % n_head == 0.
    B, T, C, n_head = 2, 8, 32, 4

    key = jax.random.PRNGKey(0)
    kx, kw1, kb1, kw2, kb2 = jax.random.split(key, 5)

    x = jax.random.normal(kx, (B, T, C), dtype=jnp.float32)
    # nn.Linear params stored transposed: (in_features, out_features).
    w_attn = jax.random.normal(kw1, (C, 3 * C), dtype=jnp.float32) * (1.0 / math.sqrt(C))
    b_attn = jax.random.normal(kb1, (3 * C,), dtype=jnp.float32) * 0.02
    w_proj = jax.random.normal(kw2, (C, C), dtype=jnp.float32) * (1.0 / math.sqrt(C))
    b_proj = jax.random.normal(kb2, (C,), dtype=jnp.float32) * 0.02

    ref = self_attention_ref(x, w_attn, b_attn, w_proj, b_proj, n_head)

    # Exact-math check: f32 compute path (same kernels, f32 MXU inputs,
    # exact reciprocal).
    out_f32 = jax.block_until_ready(
        self_attention(x, w_attn, b_attn, w_proj, b_proj, n_head,
                       compute_dtype=jnp.float32))
    assert out_f32.shape == (B, T, C)
    assert jnp.allclose(out_f32, ref, atol=1e-4, rtol=1e-4), "f32 kernel mismatch"

    # Performance path: bf16 MXU inputs, f32 accumulation / softmax stats.
    out_bf16 = jax.block_until_ready(
        self_attention(x, w_attn, b_attn, w_proj, b_proj, n_head,
                       compute_dtype=jnp.bfloat16))
    assert out_bf16.shape == (B, T, C)
    assert float(jnp.max(jnp.abs(out_bf16 - ref))) < 1e-1, "bf16 kernel mismatch"

    print("KERNEL_OK")
</pallas_src>

<mosaic_0001>
module attributes {stable_mosaic.version = 11 : i64} {
  func.func @_qkv_proj_kernel(%arg0: i32, %arg1: i32, %arg2: memref<1x8x32xf32, #tpu.memory_space<vmem>>, %arg3: memref<32x96xf32, #tpu.memory_space<vmem>>, %arg4: memref<1x96xf32, #tpu.memory_space<vmem>>, %arg5: memref<1x8x32xf32, #tpu.memory_space<vmem>>, %arg6: memref<1x8x32xf32, #tpu.memory_space<vmem>>, %arg7: memref<1x8x32xf32, #tpu.memory_space<vmem>>) attributes {dimension_semantics = [#tpu.dimension_semantics<parallel>, #tpu.dimension_semantics<parallel>], iteration_bounds = array<i64: 2, 1>, scalar_prefetch = 0 : i64, scratch_operands = 0 : i64, tpu.core_type = #tpu.core_type<tc>, window_params = [{transform_indices = @transform_0, window_bounds = array<i64: 1, 8, 32>}, {pipeline_mode = #tpu.pipeline_mode<synchronous>, transform_indices = @transform_1, window_bounds = array<i64: 32, 96>}, {pipeline_mode = #tpu.pipeline_mode<synchronous>, transform_indices = @transform_2, window_bounds = array<i64: 1, 96>}, {transform_indices = @transform_3, window_bounds = array<i64: 1, 8, 32>}, {transform_indices = @transform_4, window_bounds = array<i64: 1, 8, 32>}, {transform_indices = @transform_5, window_bounds = array<i64: 1, 8, 32>}]} {
    %c0 = arith.constant 0 : index
    %c0_0 = arith.constant 0 : index
    %c0_1 = arith.constant 0 : index
    %0 = vector.load %arg2[%c0, %c0_0, %c0_1] : memref<1x8x32xf32, #tpu.memory_space<vmem>>, vector<1x8x32xf32>
    %1 = vector.shape_cast %0 : vector<1x8x32xf32> to vector<8x32xf32>
    %c0_2 = arith.constant 0 : index
    %c0_3 = arith.constant 0 : index
    %2 = vector.load %arg3[%c0_2, %c0_3] : memref<32x96xf32, #tpu.memory_space<vmem>>, vector<32x96xf32>
    %cst = arith.constant dense<0.000000e+00> : vector<8x96xf32>
    %3 = tpu.matmul %1, %2, %cst {dimension_numbers = #tpu.dot_dimension_numbers<[1], [0], [0], [1], [0, 0, 1, 1], [], []>} : vector<8x32xf32>, vector<32x96xf32>, vector<8x96xf32> -> vector<8x96xf32>
    %c0_4 = arith.constant 0 : index
    %c0_5 = arith.constant 0 : index
    %4 = vector.load %arg4[%c0_4, %c0_5] : memref<1x96xf32, #tpu.memory_space<vmem>>, vector<1x96xf32>
    %5 = vector.broadcast %4 : vector<1x96xf32> to vector<8x96xf32>
    %6 = arith.addf %3, %5 : vector<8x96xf32>
    %7 = vector.extract_strided_slice %6 {offsets = [0, 0], sizes = [8, 32], strides = [1, 1]} : vector<8x96xf32> to vector<8x32xf32>
    %c0_6 = arith.constant 0 : index
    %c0_7 = arith.constant 0 : index
    %c0_8 = arith.constant 0 : index
    %8 = vector.load %arg5[%c0_6, %c0_7, %c0_8] : memref<1x8x32xf32, #tpu.memory_space<vmem>>, vector<1x8x32xf32>
    %9 = vector.shape_cast %8 : vector<1x8x32xf32> to vector<8x32xf32>
    %10 = vector.shape_cast %7 : vector<8x32xf32> to vector<1x8x32xf32>
    tpu.vector_store %arg5[%c0_6, %c0_7, %c0_8], %10 {strides = array<i32>} : memref<1x8x32xf32, #tpu.memory_space<vmem>>, vector<1x8x32xf32>,
    %11 = vector.extract_strided_slice %6 {offsets = [0, 32], sizes = [8, 32], strides = [1, 1]} : vector<8x96xf32> to vector<8x32xf32>
    %c0_9 = arith.constant 0 : index
    %c0_10 = arith.constant 0 : index
    %c0_11 = arith.constant 0 : index
    %12 = vector.load %arg6[%c0_9, %c0_10, %c0_11] : memref<1x8x32xf32, #tpu.memory_space<vmem>>, vector<1x8x32xf32>
    %13 = vector.shape_cast %12 : vector<1x8x32xf32> to vector<8x32xf32>
    %14 = vector.shape_cast %11 : vector<8x32xf32> to vector<1x8x32xf32>
    tpu.vector_store %arg6[%c0_9, %c0_10, %c0_11], %14 {strides = array<i32>} : memref<1x8x32xf32, #tpu.memory_space<vmem>>, vector<1x8x32xf32>,
    %15 = vector.extract_strided_slice %6 {offsets = [0, 64], sizes = [8, 32], strides = [1, 1]} : vector<8x96xf32> to vector<8x32xf32>
    %c0_12 = arith.constant 0 : index
    %c0_13 = arith.constant 0 : index
    %c0_14 = arith.constant 0 : index
    %16 = vector.load %arg7[%c0_12, %c0_13, %c0_14] : memref<1x8x32xf32, #tpu.memory_space<vmem>>, vector<1x8x32xf32>
    %17 = vector.shape_cast %16 : vector<1x8x32xf32> to vector<8x32xf32>
    %18 = vector.shape_cast %15 : vector<8x32xf32> to vector<1x8x32xf32>
    tpu.vector_store %arg7[%c0_12, %c0_13, %c0_14], %18 {strides = array<i32>} : memref<1x8x32xf32, #tpu.memory_space<vmem>>, vector<1x8x32xf32>,
    return
  }
  func.func @transform_0(%arg0: i32, %arg1: i32) -> (i32, i32, i32) {
    %c0_i32 = arith.constant 0 : i32
    %c0_i32_0 = arith.constant 0 : i32
    return %arg0, %arg1, %c0_i32 : i32, i32, i32
  }
  func.func @transform_1(%arg0: i32, %arg1: i32) -> (i32, i32) {
    %c0_i32 = arith.constant 0 : i32
    %c0_i32_0 = arith.constant 0 : i32
    %c0_i32_1 = arith.constant 0 : i32
    return %c0_i32, %c0_i32_0 : i32, i32
  }
  func.func @transform_2(%arg0: i32, %arg1: i32) -> (i32, i32) {
    %c0_i32 = arith.constant 0 : i32
    %c0_i32_0 = arith.constant 0 : i32
    %c0_i32_1 = arith.constant 0 : i32
    return %c0_i32, %c0_i32_0 : i32, i32
  }
  func.func @transform_3(%arg0: i32, %arg1: i32) -> (i32, i32, i32) {
    %c0_i32 = arith.constant 0 : i32
    %c0_i32_0 = arith.constant 0 : i32
    return %arg0, %arg1, %c0_i32 : i32, i32, i32
  }
  func.func @transform_4(%arg0: i32, %arg1: i32) -> (i32, i32, i32) {
    %c0_i32 = arith.constant 0 : i32
    %c0_i32_0 = arith.constant 0 : i32
    return %arg0, %arg1, %c0_i32 : i32, i32, i32
  }
  func.func @transform_5(%arg0: i32, %arg1: i32) -> (i32, i32, i32) {
    %c0_i32 = arith.constant 0 : i32
    %c0_i32_0 = arith.constant 0 : i32
    return %arg0, %arg1, %c0_i32 : i32, i32, i32
  }
}

</mosaic_0001>

<llo_original>
// kernel: tpu_custom_call.1
$region0: #{tpu_custom_call.1}
  #allocation0 [shape = 'u32[]', space=smem, size = 0x4, offset = 0x4, fixed_abs, tag = 'smem constant byte address 0x4 - core index']
  #allocation1 [shape = 'u32[144,128]{1,0:T(1,128)}', space=vmem, size = 0x12000, scoped, tag = 'internal scratch']
  %s0 = inlined_call_operand.hbm [shape: f32[2,8,32], index: 0, kind: input, shape index: {}]
  %s1 = inlined_call_operand.hbm [shape: f32[32,96], index: 1, kind: input, shape index: {}]
  %s2 = inlined_call_operand.hbm [shape: f32[1,96], index: 2, kind: input, shape index: {}]
  %s3 = inlined_call_operand.hbm [shape: f32[2,8,32], index: 3, kind: output, shape index: {0}]
  %s4 = inlined_call_operand.hbm [shape: f32[2,8,32], index: 4, kind: output, shape index: {1}]
  %s5 = inlined_call_operand.hbm [shape: f32[2,8,32], index: 5, kind: output, shape index: {2}]
  %6 = xla_tuple %s3, %s4, %s5
  %s7 = sld [smem:[#allocation0]]
  $region73: #{tpu_custom_call.1} parent=0
    _
  %s9 = ssub.s32 1, %s7
  %s10 = scalar_select 0, %s9, %s7
  $region1: #{tpu_custom_call.1} parent=0
    #allocation2 [shape = 'u8[8192]{0}', space=vmem, size = 0x2000, scoped, tag = 'input window, operand 0']
    #allocation3 [shape = 's32[2]{0}', space=sflag, size = 0x8, scoped, tag = 'scoped memory for tpu_custom_call.1']
    #allocation4 [shape = 's32[2]{0}', space=sflag, size = 0x8, scoped, tag = 'scoped memory for tpu_custom_call.1']
    #allocation5 [shape = 'u8[16384]{0}', space=vmem, size = 0x4000, scoped, tag = 'input window, operand 1, single buffered']
    #allocation6 [shape = 's32[1]{0}', space=sflag, size = 0x4, scoped, tag = 'scoped memory for tpu_custom_call.1']
    #allocation7 [shape = 'u8[512]{0}', space=vmem, size = 0x400, scoped, tag = 'input window, operand 2, single buffered']
    #allocation8 [shape = 'u8[8192]{0}', space=vmem, size = 0x2000, scoped, tag = 'output window, operand 0']
    #allocation9 [shape = 'u8[8192]{0}', space=vmem, size = 0x2000, scoped, tag = 'output window, operand 1']
    #allocation10 [shape = 's32[2]{0}', space=sflag, size = 0x8, scoped, tag = 'scoped memory for tpu_custom_call.1']
    #allocation11 [shape = 'u8[8192]{0}', space=vmem, size = 0x2000, scoped, tag = 'output window, operand 2']
    %11 = vsyncpa [#allocation3], 0
    %s12 = scalar_lea.sflag [#allocation3], 1
    %13 = vsyncpa %s12, 0
    %14 = vsyncpa [#allocation6], 0
    %15 = vsyncpa [#allocation4], 0
    %s16 = scalar_lea.sflag [#allocation4], 1
    %17 = vsyncpa %s16, 0
    %18 = vsyncpa [#allocation10], 0
    %s19 = scalar_lea.sflag [#allocation10], 1
    %20 = vsyncpa %s19, 0
    loop: start=0, step=1, limit=4
    $region2: #{tpu_custom_call.1} parent=1 // loop_pre_header
      _
    $region3: #{tpu_custom_call.1} parent=1 // loop_header
      %s22 = sphi 0, %s26
      %p23 = scmp.ge.s32.totalorder %s22, 4
      %s29 = sphi 0, %s41
      %s30 = sphi 0, %s37
      %s31 = sphi 0, %s29
      %s32 = sphi 0, %s30
      %s33 = sphi 0, %s31
      %s34 = sphi 0, %s32
      %s46 = sphi 0, %s48
      %s49 = sphi 0, %s46
      %s50 = sphi 0, %s49
      %s66 = sphi 0, %s50
      %s70 = sphi 0, %s70
      %s72 = sphi 0, %s70
      %s73 = sphi 0, %s72
      %s87 = sphi 0, %s73
      %s91 = sphi 0, %s91
      %s93 = sphi 0, %s91
      %s94 = sphi 0, %s93
      %s108 = sphi 0, %s94
      %s116 = sphi 0, %s118
      %s119 = sphi 0, %s116
      %s120 = sphi 0, %s119
      %s136 = sphi 0, %s120
      %s144 = sphi 0, %s146
      %s147 = sphi 0, %s144
      %s148 = sphi 0, %s147
      %s164 = sphi 0, %s148
      %s172 = sphi 0, %s174
      %s175 = sphi 0, %s172
      %s176 = sphi 0, %s175
      %s192 = sphi 0, %s176
    $region4: #{tpu_custom_call.1} parent=1 // loop_header_branch
      %25 = sbr.rel (%p23) target = $region8
    $region5: #{tpu_custom_call.1} parent=1 // loop_body
      %s27 = ssub.s32 %s22, 1
      %s28 = ssub.s32 %s22, 2
      %s35 = sadd.s32 1, %s30
      %p36 = scmp.ge.s32.totalorder %s35, 1
      %s37 = scalar_select %p36, 0, %s35
      %s38 = sadd.s32 1, %s29
      %s39 = scalar_select %p36, %s38, %s29
      %p40 = scmp.ge.s32.totalorder %s39, 2
      %s41 = scalar_select %p40, 0, %s39
      %s42 = ssub.s32 %s29, %s41
      %s43 = ssub.s32 %s30, %s37
      %s44 = sor.u32 %s42, %s43
      %p45 = scmp.eq.s32.totalorder %s44, 0
      %s47 = sadd.s32 %s46, 1
      %s48 = scalar_select %p45, %s46, %s47
      %p51 = pneg %p45
      %p52 = scmp.eq.s32.totalorder %s22, 1
      %p53 = por %p51, %p52
      %p54 = scmp.ne.s32.totalorder %s46, %s49
      %p55 = scmp.eq.s32.totalorder %s22, 0
      %p56 = por %p54, %p55
      %p57 = scmp.ne.s32.totalorder %s46, %s49
      %p58 = scmp.eq.s32.totalorder %s27, 1
      %p59 = por %p57, %p58
      %p60 = scmp.ne.s32.totalorder %s49, %s50
      %p61 = scmp.eq.s32.totalorder %s27, 0
      %p62 = por %p60, %p61
      %p63 = scmp.ne.s32.totalorder %s49, %s50
      %p64 = scmp.eq.s32.totalorder %s28, 1
      %p65 = por %p63, %p64
      %p67 = scmp.ne.s32.totalorder %s50, %s66
      %p68 = scmp.eq.s32.totalorder %s28, 0
      %p69 = por %p67, %p68
      %s71 = sadd.s32 %s70, 1
      %p74 = scmp.eq.s32.totalorder %s22, 1
      %p75 = scmp.ne.s32.totalorder %s70, %s72
      %p76 = scmp.eq.s32.totalorder %s22, 0
      %p77 = por %p75, %p76
      %p78 = scmp.ne.s32.totalorder %s70, %s72
      %p79 = scmp.eq.s32.totalorder %s27, 1
      %p80 = por %p78, %p79
      %p81 = scmp.ne.s32.totalorder %s72, %s73
      %p82 = scmp.eq.s32.totalorder %s27, 0
      %p83 = por %p81, %p82
      %p84 = scmp.ne.s32.totalorder %s72, %s73
      %p85 = scmp.eq.s32.totalorder %s28, 1
      %p86 = por %p84, %p85
      %p88 = scmp.ne.s32.totalorder %s73, %s87
      %p89 = scmp.eq.s32.totalorder %s28, 0
      %p90 = por %p88, %p89
      %s92 = sadd.s32 %s91, 1
      %p95 = scmp.eq.s32.totalorder %s22, 1
      %p96 = scmp.ne.s32.totalorder %s91, %s93
      %p97 = scmp.eq.s32.totalorder %s22, 0
      %p98 = por %p96, %p97
      %p99 = scmp.ne.s32.totalorder %s91, %s93
      %p100 = scmp.eq.s32.totalorder %s27, 1
      %p101 = por %p99, %p100
      %p102 = scmp.ne.s32.totalorder %s93, %s94
      %p103 = scmp.eq.s32.totalorder %s27, 0
      %p104 = por %p102, %p103
      %p105 = scmp.ne.s32.totalorder %s93, %s94
      %p106 = scmp.eq.s32.totalorder %s28, 1
      %p107 = por %p105, %p106
      %p109 = scmp.ne.s32.totalorder %s94, %s108
      %p110 = scmp.eq.s32.totalorder %s28, 0
      %p111 = por %p109, %p110
      %s112 = ssub.s32 %s29, %s41
      %s113 = ssub.s32 %s30, %s37
      %s114 = sor.u32 %s112, %s113
      %p115 = scmp.eq.s32.totalorder %s114, 0
      %s117 = sadd.s32 %s116, 1
      %s118 = scalar_select %p115, %s116, %s117
      %p121 = pneg %p115
      %p122 = scmp.eq.s32.totalorder %s22, 1
      %p123 = por %p121, %p122
      %p124 = scmp.ne.s32.totalorder %s116, %s119
      %p125 = scmp.eq.s32.totalorder %s22, 0
      %p126 = por %p124, %p125
      %p127 = scmp.ne.s32.totalorder %s116, %s119
      %p128 = scmp.eq.s32.totalorder %s27, 1
      %p129 = por %p127, %p128
      %p130 = scmp.ne.s32.totalorder %s119, %s120
      %p131 = scmp.eq.s32.totalorder %s27, 0
      %p132 = por %p130, %p131
      %p133 = scmp.ne.s32.totalorder %s119, %s120
      %p134 = scmp.eq.s32.totalorder %s28, 1
      %p135 = por %p133, %p134
      %p137 = scmp.ne.s32.totalorder %s120, %s136
      %p138 = scmp.eq.s32.totalorder %s28, 0
      %p139 = por %p137, %p138
      %s140 = ssub.s32 %s29, %s41
      %s141 = ssub.s32 %s30, %s37
      %s142 = sor.u32 %s140, %s141
      %p143 = scmp.eq.s32.totalorder %s142, 0
      %s145 = sadd.s32 %s144, 1
      %s146 = scalar_select %p143, %s144, %s145
      %p149 = pneg %p143
      %p150 = scmp.eq.s32.totalorder %s22, 1
      %p151 = por %p149, %p150
      %p152 = scmp.ne.s32.totalorder %s144, %s147
      %p153 = scmp.eq.s32.totalorder %s22, 0
      %p154 = por %p152, %p153
      %p155 = scmp.ne.s32.totalorder %s144, %s147
      %p156 = scmp.eq.s32.totalorder %s27, 1
      %p157 = por %p155, %p156
      %p158 = scmp.ne.s32.totalorder %s147, %s148
      %p159 = scmp.eq.s32.totalorder %s27, 0
      %p160 = por %p158, %p159
      %p161 = scmp.ne.s32.totalorder %s147, %s148
      %p162 = scmp.eq.s32.totalorder %s28, 1
      %p163 = por %p161, %p162
      %p165 = scmp.ne.s32.totalorder %s148, %s164
      %p166 = scmp.eq.s32.totalorder %s28, 0
      %p167 = por %p165, %p166
      %s168 = ssub.s32 %s29, %s41
      %s169 = ssub.s32 %s30, %s37
      %s170 = sor.u32 %s168, %s169
      %p171 = scmp.eq.s32.totalorder %s170, 0
      %s173 = sadd.s32 %s172, 1
      %s174 = scalar_select %p171, %s172, %s173
      %p177 = pneg %p171
      %p178 = scmp.eq.s32.totalorder %s22, 1
      %p179 = por %p177, %p178
      %p180 = scmp.ne.s32.totalorder %s172, %s175
      %p181 = scmp.eq.s32.totalorder %s22, 0
      %p182 = por %p180, %p181
      %p183 = scmp.ne.s32.totalorder %s172, %s175
      %p184 = scmp.eq.s32.totalorder %s27, 1
      %p185 = por %p183, %p184
      %p186 = scmp.ne.s32.totalorder %s175, %s176
      %p187 = scmp.eq.s32.totalorder %s27, 0
      %p188 = por %p186, %p187
      %p189 = scmp.ne.s32.totalorder %s175, %s176
      %p190 = scmp.eq.s32.totalorder %s28, 1
      %p191 = por %p189, %p190
      %p193 = scmp.ne.s32.totalorder %s176, %s192
      %p194 = scmp.eq.s32.totalorder %s28, 0
      %p195 = por %p193, %p194
      %p196 = scmp.le.s32.totalorder 1, %s22
      %p197 = scmp.lt.s32.totalorder %s22, 3
      %p198 = pnand %p196, %p197
      %p199 = pneg %p198
      // Predicated region
      $region9: #{tpu_custom_call.1} parent=5 // pred_check
        _
      $region10: #{tpu_custom_call.1} parent=5 // pred_check_branch
        %201 = sbr.rel (%p198) target = $region12
      $region11: #{tpu_custom_call.1} parent=5 // pred_region
        %s202 = ssub.s32 %s22, 1
        // Predicated region
        $region13: #{tpu_custom_call.1} parent=11 // pred_check
          %p203 = pneg %p83
        $region14: #{tpu_custom_call.1} parent=11 // pred_check_branch
          %205 = sbr.rel (%p203) target = $region16
        $region15: #{tpu_custom_call.1} parent=11 // pred_region
          %s207 = ssub.s32 512, 512
          %208 = vsyncadd [#allocation6], %s207
          %s209 = sshll.u32 [#allocation5], 4
          %s210 = int_to_ptr.vmem [resolvable:$true] %s209
          %215 = dma.hbm_to_vmem [thread:$0]  %s1, 512, %s210, [#allocation6], 128, 128, 8
        $region16: #{tpu_custom_call.1} parent=11 // pred_fallthru
          _
        // Predicated region
        $region17: #{tpu_custom_call.1} parent=11 // pred_check
          %p216 = pneg %p104
        $region18: #{tpu_custom_call.1} parent=11 // pred_check_branch
          %218 = sbr.rel (%p216) target = $region20
        $region19: #{tpu_custom_call.1} parent=11 // pred_region
          %s220 = ssub.s32 16, 16
          %221 = vsyncadd [#allocation6], %s220
          %s223 = sshll.u32 [#allocation7], 4
          %s224 = int_to_ptr.vmem [resolvable:$true] %s223
          %226 = dma.hbm_to_vmem [thread:$0]  %s2, 16, %s224, [#allocation6]
        $region20: #{tpu_custom_call.1} parent=11 // pred_fallthru
          _
      $region12: #{tpu_custom_call.1} parent=5 // pred_fallthru
        _
      %p227 = scmp.lt.s32.totalorder %s22, 2
      // Predicated region
      $region21: #{tpu_custom_call.1} parent=5 // pred_check
        %p228 = pneg %p227
      $region22: #{tpu_custom_call.1} parent=5 // pred_check_branch
        %230 = sbr.rel (%p228) target = $region24
      $region23: #{tpu_custom_call.1} parent=5 // pred_region
        // Predicated region
        $region25: #{tpu_custom_call.1} parent=23 // pred_check
          %p231 = pneg %p56
        $region26: #{tpu_custom_call.1} parent=23 // pred_check_branch
          %233 = sbr.rel (%p231) target = $region28
        $region27: #{tpu_custom_call.1} parent=23 // pred_region
          %s234 = sand.u32 %s46, 1
          %s235 = scalar_lea.sflag [#allocation3], %s234
          %s236 = sand.u32 %s46, 1
          %s237 = smul.addr %s236, 8
          %s238 = scalar_lea.vmem [#allocation2], %s237
          %s240 = ssub.s32 128, 128
          %241 = vsyncadd %s235, %s240
          %s242 = sadd.s32 %s30, %s29
          %s243 = smul.addr %s242, 128
          %s244 = scalar_lea.hbm %s0, %s243
          %s246 = sshll.u32 %s238, 4
          %s247 = int_to_ptr.vmem [resolvable:$true] %s246
          %249 = dma.hbm_to_vmem [thread:$0]  %s244, 128, %s247, %s235
        $region28: #{tpu_custom_call.1} parent=23 // pred_fallthru
          _
      $region24: #{tpu_custom_call.1} parent=5 // pred_fallthru
        _
      %p250 = scmp.le.s32.totalorder 1, %s22
      %p251 = scmp.lt.s32.totalorder %s22, 3
      %p252 = pnand %p250, %p251
      %p253 = pneg %p252
      // Predicated region
      $region29: #{tpu_custom_call.1} parent=5 // pred_check
        _
      $region30: #{tpu_custom_call.1} parent=5 // pred_check_branch
        %255 = sbr.rel (%p252) target = $region32
      $region31: #{tpu_custom_call.1} parent=5 // pred_region
        %s256 = ssub.s32 %s22, 1
        %s257 = sand.u32 %s49, 1
        %s258 = scalar_lea.sflag [#allocation3], %s257
        %s259 = sand.u32 %s49, 1
        %s260 = smul.addr %s259, 8
        %s261 = scalar_lea.vmem [#allocation2], %s260
        // Predicated region
        $region33: #{tpu_custom_call.1} parent=31 // pred_check
          %p262 = pneg %p62
        $region34: #{tpu_custom_call.1} parent=31 // pred_check_branch
          %264 = sbr.rel (%p262) target = $region36
        $region35: #{tpu_custom_call.1} parent=31 // pred_region
          %265 = dma.done %s258, 128
        $region36: #{tpu_custom_call.1} parent=31 // pred_fallthru
          _
        // Predicated region
        $region37: #{tpu_custom_call.1} parent=31 // pred_check
          %p266 = pneg %p83
        $region38: #{tpu_custom_call.1} parent=31 // pred_check_branch
          %268 = sbr.rel (%p266) target = $region40
        $region39: #{tpu_custom_call.1} parent=31 // pred_region
          %269 = dma.done [#allocation6], 512
        $region40: #{tpu_custom_call.1} parent=31 // pred_fallthru
          _
        // Predicated region
        $region41: #{tpu_custom_call.1} parent=31 // pred_check
          %p270 = pneg %p104
        $region42: #{tpu_custom_call.1} parent=31 // pred_check_branch
          %272 = sbr.rel (%p270) target = $region44
        $region43: #{tpu_custom_call.1} parent=31 // pred_region
          %273 = dma.done [#allocation6], 16
        $region44: #{tpu_custom_call.1} parent=31 // pred_fallthru
          _
        %s274 = sand.u32 %s49, 1
        %s275 = scalar_lea.sflag [#allocation3], %s274
        %s276 = sand.u32 %s49, 1
        %s277 = smul.addr %s276, 8
        %s278 = scalar_lea.vmem [#allocation2], %s277
        %p279 = pneg %p62
        %p280 = pneg %p59
        %p281 = pneg %p83
        %p282 = pneg %p80
        %p283 = pneg %p104
        %p284 = pneg %p101
        %p285 = pneg %p132
        %p286 = pneg %p129
        %s287 = sand.u32 %s119, 1
        %s288 = scalar_lea.sflag [#allocation4], %s287
        %s289 = sand.u32 %s119, 1
        %s290 = smul.addr %s289, 8
        %s291 = scalar_lea.vmem [#allocation8], %s290
        %p292 = pneg %p160
        %p293 = pneg %p157
        %s294 = sand.u32 %s27, 1
        %s295 = scalar_lea.sflag [#allocation10], %s294
        %s296 = sand.u32 %s147, 1
        %s297 = smul.addr %s296, 8
        %s298 = scalar_lea.vmem [#allocation9], %s297
        %p299 = pneg %p188
        %p300 = pneg %p185
        %s301 = sand.u32 %s27, 1
        %s302 = scalar_lea.sflag [#allocation10], %s301
        %s303 = sand.u32 %s175, 1
        %s304 = smul.addr %s303, 8
        %s305 = scalar_lea.vmem [#allocation11], %s304
        %v306 = vld [vmem:[%s261] sm:$0xff]
        %v307 = vld [vmem:[#allocation5] sm:$0xff]
        %v308 = vld [vmem:[#allocation5 + $0x8] sm:$0xff]
        %v309 = vld [vmem:[#allocation5 + $0x10] sm:$0xff]
        %v310 = vld [vmem:[#allocation5 + $0x18] sm:$0xff]
        %v311 = vld [vmem:[#allocation7] sm:$0x1]
        %v313 = vlaneseq
        %v314 = vshrl.u32 %v313, 7
        %v315 = vsub.s32 0, %v314
        %v316 = vrot.slane %v311, %v315
        %vm318 = vcmask 261120
        %v320 = vsel %vm318, %v306, 0
        %322 = vmatprep.subr.mxu0 0.0
        %323 = vmatpush1.msra.mxu0 %v307
        %324 = vmatprep.subr.mxu0 0.0
        %325 = vmatpush1.msra.mxu0 %v308
        %326 = vmatprep.subr.mxu0 0.0
        %327 = vmatpush1.msra.mxu0 %v309
        %328 = vmatprep.subr.mxu0 0.0
        %329 = vmatpush1.msra.mxu0 %v310
        %330 = vmatprep.subr.mxu0 0.0
        %331 = vmatpush1.msra.mxu0 0.0
        %332 = vmatprep.subr.mxu0 0.0
        %333 = vmatpush1.msra.mxu0 0.0
        %334 = vmatprep.subr.mxu0 0.0
        %335 = vmatpush1.msra.mxu0 0.0
        %336 = vmatprep.subr.mxu0 0.0
        %337 = vmatpush1.msra.mxu0 0.0
        %338 = vmatprep.subr.mxu0 0.0
        %339 = vmatpush1.msra.mxu0 0.0
        %340 = vmatprep.subr.mxu0 0.0
        %341 = vmatpush1.msra.mxu0 0.0
        %342 = vmatprep.subr.mxu0 0.0
        %343 = vmatpush1.msra.mxu0 0.0
        %344 = vmatprep.subr.mxu0 0.0
        %345 = vmatpush1.msra.mxu0 0.0
        %346 = vmatprep.subr.mxu0 0.0
        %347 = vmatpush1.msra.mxu0 0.0
        %348 = vmatprep.subr.mxu0 0.0
        %349 = vmatpush1.msra.mxu0 0.0
        %350 = vmatprep.subr.mxu0 0.0
        %351 = vmatpush1.msra.mxu0 0.0
        %352 = vmatprep.subr.mxu0 0.0
        %353 = vmatpush1.msra.mxu0 0.0
        %354 = vmatprep.subr.mxu0 0.0
        %355 = vmatpush1.msra.mxu0 0.0
        %356 = vmatprep.subr.mxu0 0.0
        %357 = vmatpush1.msra.mxu0 0.0
        %358 = vmatprep.subr.mxu0 0.0
        %359 = vmatpush1.msra.mxu0 0.0
        %360 = vmatprep.subr.mxu0 0.0
        %361 = vmatpush1.msra.mxu0 0.0
        %362 = vmatprep.subr.mxu0 0.0
        %363 = vmatpush1.msra.mxu0 0.0
        %364 = vmatprep.subr.mxu0 0.0
        %365 = vmatpush1.msra.mxu0 0.0
        %366 = vmatprep.subr.mxu0 0.0
        %367 = vmatpush1.msra.mxu0 0.0
        %368 = vmatprep.subr.mxu0 0.0
        %369 = vmatpush1.msra.mxu0 0.0
        %370 = vmatprep.subr.mxu0 0.0
        %371 = vmatpush1.msra.mxu0 0.0
        %372 = vmatprep.subr.mxu0 0.0
        %373 = vmatpush1.msra.mxu0 0.0
        %374 = vmatprep.subr.mxu0 0.0
        %375 = vmatpush1.msra.mxu0 0.0
        %376 = vmatprep.subr.mxu0 0.0
        %377 = vmatpush1.msra.mxu0 0.0
        %378 = vmatprep.subr.mxu0 0.0
        %379 = vmatpush1.msra.mxu0 0.0
        %380 = vmatprep.subr.mxu0 0.0
        %381 = vmatpush1.msra.mxu0 0.0
        %382 = vmatprep.subr.mxu0 0.0
        %383 = vmatpush1.msra.mxu0 0.0
        %384 = vmatprep.subr.mxu0 0.0
        %385 = vmatpush1.msra.mxu0 0.0
        %386 = vmatprep.mubr.f32.mxu0 0.0
        %387 = vmatmul.mubr.f32.gmra.mrb[0].mxu0 %v320
        %v388 = vpop.f32.mrb[0].mxu0
        %v389 = vadd.f32 %v316, %v388
        %v390 = vpop.f32.mrb[0].mxu0
        %391 = vdwg.mxu0
        %392 = vst.msk [vmem:[%s291] sm:$0xff] %vm318, %v389
        %394 = vrot.lane.b32.xlu0 %v389, 96
        %v395 = vpop.permute.xlu0 %394
        %397 = vst.msk [vmem:[%s298] sm:$0xff] %vm318, %v395
        %398 = vrot.lane.b32.xlu0 %v389, 64
        %v399 = vpop.permute.xlu0 %398
        %401 = vst.msk [vmem:[%s305] sm:$0xff] %vm318, %v399
        %s402 = sand.u32 %s119, 1
        %s403 = scalar_lea.sflag [#allocation4], %s402
        %s404 = sand.u32 %s119, 1
        %s405 = smul.addr %s404, 8
        %s406 = scalar_lea.vmem [#allocation8], %s405
        %s407 = sand.u32 %s27, 1
        %s408 = scalar_lea.sflag [#allocation10], %s407
        %s409 = sand.u32 %s147, 1
        %s410 = smul.addr %s409, 8
        %s411 = scalar_lea.vmem [#allocation9], %s410
        %s412 = sand.u32 %s27, 1
        %s413 = scalar_lea.sflag [#allocation10], %s412
        %s414 = sand.u32 %s175, 1
        %s415 = smul.addr %s414, 8
        %s416 = scalar_lea.vmem [#allocation11], %s415
        // Predicated region
        $region45: #{tpu_custom_call.1} parent=31 // pred_check
          %p417 = pneg %p129
        $region46: #{tpu_custom_call.1} parent=31 // pred_check_branch
          %419 = sbr.rel (%p417) target = $region48
        $region47: #{tpu_custom_call.1} parent=31 // pred_region
          %s421 = ssub.s32 128, 128
          %422 = vsyncadd %s403, %s421
          %s423 = sadd.s32 %s32, %s31
          %s424 = smul.addr %s423, 128
          %s425 = scalar_lea.hbm %s3, %s424
          %s427 = sshll.u32 %s406, 4
          %s428 = int_to_ptr.vmem [resolvable:$true] %s427
          %430 = dma.vmem_to_hbm [thread:$0]  %s428, 128, %s425, %s403
        $region48: #{tpu_custom_call.1} parent=31 // pred_fallthru
          _
        // Predicated region
        $region49: #{tpu_custom_call.1} parent=31 // pred_check
          %p431 = pneg %p157
        $region50: #{tpu_custom_call.1} parent=31 // pred_check_branch
          %433 = sbr.rel (%p431) target = $region52
        $region51: #{tpu_custom_call.1} parent=31 // pred_region
          %s435 = ssub.s32 128, 128
          %436 = vsyncadd %s408, %s435
          %s437 = sadd.s32 %s32, %s31
          %s438 = smul.addr %s437, 128
          %s439 = scalar_lea.hbm %s4, %s438
          %s441 = sshll.u32 %s411, 4
          %s442 = int_to_ptr.vmem [resolvable:$true] %s441
          %444 = dma.vmem_to_hbm [thread:$0]  %s442, 128, %s439, %s408
        $region52: #{tpu_custom_call.1} parent=31 // pred_fallthru
          _
        // Predicated region
        $region53: #{tpu_custom_call.1} parent=31 // pred_check
          %p445 = pneg %p185
        $region54: #{tpu_custom_call.1} parent=31 // pred_check_branch
          %447 = sbr.rel (%p445) target = $region56
        $region55: #{tpu_custom_call.1} parent=31 // pred_region
          %s449 = ssub.s32 128, 128
          %450 = vsyncadd %s413, %s449
          %s451 = sadd.s32 %s32, %s31
          %s452 = smul.addr %s451, 128
          %s453 = scalar_lea.hbm %s5, %s452
          %s455 = sshll.u32 %s416, 4
          %s456 = int_to_ptr.vmem [resolvable:$true] %s455
          %458 = dma.vmem_to_hbm [thread:$0]  %s456, 128, %s453, %s413
        $region56: #{tpu_custom_call.1} parent=31 // pred_fallthru
          _
      $region32: #{tpu_custom_call.1} parent=5 // pred_fallthru
        _
      %p459 = scmp.le.s32.totalorder 2, %s22
      // Predicated region
      $region57: #{tpu_custom_call.1} parent=5 // pred_check
        %p460 = pneg %p459
      $region58: #{tpu_custom_call.1} parent=5 // pred_check_branch
        %462 = sbr.rel (%p460) target = $region60
      $region59: #{tpu_custom_call.1} parent=5 // pred_region
        %s463 = ssub.s32 %s22, 2
        // Predicated region
        $region61: #{tpu_custom_call.1} parent=59 // pred_check
          %p464 = pneg %p135
        $region62: #{tpu_custom_call.1} parent=59 // pred_check_branch
          %466 = sbr.rel (%p464) target = $region64
        $region63: #{tpu_custom_call.1} parent=59 // pred_region
          %s467 = sand.u32 %s120, 1
          %s468 = scalar_lea.sflag [#allocation4], %s467
          %s469 = sand.u32 %s120, 1
          %s470 = smul.addr %s469, 8
          %s471 = scalar_lea.vmem [#allocation8], %s470
          %472 = dma.done %s468, 128
        $region64: #{tpu_custom_call.1} parent=59 // pred_fallthru
          _
        // Predicated region
        $region65: #{tpu_custom_call.1} parent=59 // pred_check
          %p473 = pneg %p163
        $region66: #{tpu_custom_call.1} parent=59 // pred_check_branch
          %475 = sbr.rel (%p473) target = $region68
        $region67: #{tpu_custom_call.1} parent=59 // pred_region
          %s476 = sand.u32 %s28, 1
          %s477 = scalar_lea.sflag [#allocation10], %s476
          %s478 = sand.u32 %s148, 1
          %s479 = smul.addr %s478, 8
          %s480 = scalar_lea.vmem [#allocation9], %s479
          %481 = dma.done %s477, 128
        $region68: #{tpu_custom_call.1} parent=59 // pred_fallthru
          _
        // Predicated region
        $region69: #{tpu_custom_call.1} parent=59 // pred_check
          %p482 = pneg %p191
        $region70: #{tpu_custom_call.1} parent=59 // pred_check_branch
          %484 = sbr.rel (%p482) target = $region72
        $region71: #{tpu_custom_call.1} parent=59 // pred_region
          %s485 = sand.u32 %s28, 1
          %s486 = scalar_lea.sflag [#allocation10], %s485
          %s487 = sand.u32 %s176, 1
          %s488 = smul.addr %s487, 8
          %s489 = scalar_lea.vmem [#allocation11], %s488
          %490 = dma.done %s486, 128
        $region72: #{tpu_custom_call.1} parent=59 // pred_fallthru
          _
      $region60: #{tpu_custom_call.1} parent=5 // pred_fallthru
        _
    $region6: #{tpu_custom_call.1} parent=1 // loop_footer
      %s26 = sadd.s32 1, %s22
    $region7: #{tpu_custom_call.1} parent=1 // loop_footer_branch
      %21 = sbr.rel target = $region3
    $region8: #{tpu_custom_call.1} parent=1 // loop_exit
      _
    %491 = vsyncpa [#allocation3], 1
    %s492 = scalar_lea.sflag [#allocation3], 1
    %493 = vsyncpa %s492, 1
    %494 = vsyncpa [#allocation6], 1
    %495 = vsyncpa [#allocation4], 1
    %s496 = scalar_lea.sflag [#allocation4], 1
    %497 = vsyncpa %s496, 1
    %498 = vsyncpa [#allocation10], 1
    %s499 = scalar_lea.sflag [#allocation10], 1
    %500 = vsyncpa %s499, 1

</llo_original>
